<compile_context>
chip_gen: v5e
topology: v5e:2x2
jax: 0.10.0
libtpu: 0.0.40
codegen_flags: <defaults>
</compile_context>

<pallas_src>
import functools

import jax
import jax.numpy as jnp
from jax import lax
from jax.experimental import pallas as pl
from jax.experimental.pallas import tpu as pltpu


def _round_up(x, m):
    return ((x + m - 1) // m) * m


def _static_pow(x, gamma):
    """x ** gamma with unrolled multiplies when gamma is a non-negative integer."""
    if float(gamma) == int(gamma) and int(gamma) >= 0:
        g = int(gamma)
        if g == 0:
            return jnp.ones_like(x)
        result = None
        base = x
        while g:
            if g & 1:
                result = base if result is None else result * base
            g >>= 1
            if g:
                base = base * base
        return result
    # Non-integer gamma: EUP exp/log path.
    return x ** jnp.float32(gamma)


def _multi_focal_loss_kernel(x_ref, t_ref, wt_ref, num_ref, den_ref,
                             *, gamma, ignore_index, n_rows, block_rows):
    i = pl.program_id(0)

    x = x_ref[...].astype(jnp.float32)      # [TN, C] logits (tile)
    t = t_ref[...]                          # [TN, 1] int32 targets
    w_t = wt_ref[...].astype(jnp.float32)   # [TN, 1] pre-gathered class weight

    TN, C = x.shape

    # Tail / ignore_index mask.  grid = cdiv(N, TN), so the last tile may be
    # over-read; rows past N (and ignore_index rows) must contribute exactly 0.
    row = i * block_rows + lax.broadcasted_iota(jnp.int32, (TN, 1), 0)
    valid = (row < n_rows) & (t != ignore_index)                     # [TN, 1]

    # Zero garbage rows before the log-sum-exp so no Inf/NaN is ever produced.
    x = jnp.where(valid, x, 0.0)

    # Stable log-sum-exp along the class axis (the only [TN, C] exp pass).
    m = jnp.max(x, axis=1, keepdims=True)
    z = x - m
    lse = jnp.log(jnp.sum(jnp.exp(z), axis=1, keepdims=True))        # [TN, 1]

    # One-hot gather of the target column (class weight is already gathered).
    col = lax.broadcasted_iota(jnp.int32, (TN, C), 1)
    onehot = col == t                                                # [TN, C]
    picked_z = jnp.sum(jnp.where(onehot, z, 0.0), axis=1, keepdims=True)

    # Focal term only on the gathered column ([TN, 1] transcendentals).
    log_pt_t = picked_z - lse                                        # [TN, 1]
    pt_t = jnp.exp(log_pt_t)
    focal_t = _static_pow(1.0 - pt_t, gamma) * log_pt_t              # [TN, 1]

    # Select-based masking: 0 * NaN can never leak into the partials.
    contrib = jnp.where(valid, -w_t * focal_t, 0.0)                  # [TN, 1]
    weight_c = jnp.where(valid, w_t, 0.0)                            # [TN, 1]

    num_ref[...] = jnp.sum(contrib, keepdims=True)                   # (1, 1)
    den_ref[...] = jnp.sum(weight_c, keepdims=True)                  # (1, 1)


def _pick_row_tile(n, c, itemsize, budget_bytes=2 << 20):
    """Row tile: ~budget_bytes of f32 per logits tile, dtype-aligned sublanes."""
    align = 8 * max(1, 4 // max(1, itemsize))   # 8 for f32, 16 for bf16
    rows = max(align, (budget_bytes // max(1, c * 4)) // align * align)
    rows = min(rows, _round_up(max(n, 1), align))
    return rows


def multi_focal_loss(logits, target, weight=None, gamma=2, ignore_index=-100,
                     block_rows=None):
    """logits: [N, C] float (f32/bf16); target: [N] int. Returns scalar f32."""
    N, C = logits.shape
    itemsize = jnp.dtype(logits.dtype).itemsize

    if weight is None:
        weight = jnp.ones((C,), jnp.float32)
    weight = jnp.asarray(weight, jnp.float32)

    t1 = jnp.asarray(target, jnp.int32)
    t2 = t1.reshape(N, 1)
    # Hoisted class-weight gather (tiny [C] table lookup); ignored rows use a
    # safe index -- they are masked out inside the kernel anyway.
    safe_t = jnp.where(t1 != ignore_index, t1, 0)
    wt2 = weight[safe_t].reshape(N, 1)

    if block_rows is None:
        tn = _pick_row_tile(N, C, itemsize)
    else:
        align = 8 * max(1, 4 // max(1, itemsize))
        tn = min(_round_up(max(block_rows, 1), align),
                 _round_up(max(N, 1), align))
    grid = pl.cdiv(N, tn)

    kernel = functools.partial(
        _multi_focal_loss_kernel, gamma=gamma, ignore_index=ignore_index,
        n_rows=N, block_rows=tn)

    cost = pl.CostEstimate(
        flops=int(6 * N * C + 10 * N),
        transcendentals=int(N * C + 2 * N),
        bytes_accessed=int(N * C * itemsize + 2 * N * 4 + 2 * grid * 4),
    )

    num_parts, den_parts = pl.pallas_call(
        kernel,
        out_shape=(jax.ShapeDtypeStruct((grid, 1), jnp.float32),
                   jax.ShapeDtypeStruct((grid, 1), jnp.float32)),
        grid=(grid,),
        in_specs=[
            pl.BlockSpec((tn, C), lambda i: (i, 0)),   # logits row tile
            pl.BlockSpec((tn, 1), lambda i: (i, 0)),   # targets row tile
            pl.BlockSpec((tn, 1), lambda i: (i, 0)),   # gathered class weights
        ],
        out_specs=(
            pl.BlockSpec((1, 1), lambda i: (i, 0)),    # per-block numerator
            pl.BlockSpec((1, 1), lambda i: (i, 0)),    # per-block denominator
        ),
        compiler_params=pltpu.CompilerParams(
            dimension_semantics=("parallel",),          # independent row tiles
            vmem_limit_bytes=32 * 1024 * 1024,          # raise v5e's 16 MiB default
        ),
        cost_estimate=cost,
    )(logits, t2, wt2)

    # reduction='mean' (weighted mean over valid rows); 0/0 -> NaN matches
    # PyTorch nll_loss when every row is ignore_index.
    return jnp.sum(num_parts) / jnp.sum(den_parts)


def _reference_loss(logits, target, weight, gamma, ignore_index):
    """Pure-JAX reference mirroring torch log_softmax + focal + nll_loss(mean)."""
    log_pt = jax.nn.log_softmax(logits.astype(jnp.float32), axis=1)
    pt = jnp.exp(log_pt)
    focal = ((1.0 - pt) ** gamma) * log_pt
    valid = (target != ignore_index)
    safe_t = jnp.where(valid, target, 0)
    picked = jnp.take_along_axis(focal, safe_t[:, None], axis=1)[:, 0]
    w_t = weight[safe_t]
    num = -jnp.sum(jnp.where(valid, w_t * picked, 0.0))
    den = jnp.sum(jnp.where(valid, w_t, 0.0))
    return num / den


if __name__ == "__main__":
    key = jax.random.PRNGKey(0)
    gamma = 2
    ignore_index = -100

    # Test 1: auto tile (single block with in-kernel tail mask), uniform weights.
    k1, k2, k3, k4 = jax.random.split(key, 4)
    N1, C1 = 50, 8
    logits1 = jax.random.normal(k1, (N1, C1), dtype=jnp.float32)
    target1 = jax.random.randint(k2, (N1,), 0, C1, dtype=jnp.int32)
    target1 = target1.at[3].set(ignore_index)
    weight1 = jnp.ones((C1,), jnp.float32)

    loss1 = multi_focal_loss(logits1, target1, weight=weight1,
                             gamma=gamma, ignore_index=ignore_index)
    loss1 = jax.block_until_ready(loss1)
    ref1 = _reference_loss(logits1, target1, weight1, gamma, ignore_index)
    assert jnp.allclose(loss1, ref1, rtol=1e-5, atol=1e-6), (loss1, ref1)

    # Test 2: forced small tile -> multiple grid blocks + non-divisible tail
    #         + non-uniform class weights.
    N2, C2 = 50, 8
    logits2 = jax.random.normal(k3, (N2, C2), dtype=jnp.float32)
    target2 = jax.random.randint(k4, (N2,), 0, C2, dtype=jnp.int32)
    target2 = target2.at[7].set(ignore_index)
    target2 = target2.at[41].set(ignore_index)
    weight2 = jnp.linspace(0.5, 2.0, C2).astype(jnp.float32)

    loss2 = multi_focal_loss(logits2, target2, weight=weight2,
                             gamma=gamma, ignore_index=ignore_index,
                             block_rows=8)   # 7 grid steps, tail block masked
    loss2 = jax.block_until_ready(loss2)
    ref2 = _reference_loss(logits2, target2, weight2, gamma, ignore_index)
    assert jnp.allclose(loss2, ref2, rtol=1e-5, atol=1e-6), (loss2, ref2)

    # Test 3: bf16 logits streamed as-is (half the HBM traffic), f32 math inside.
    logits3 = logits2.astype(jnp.bfloat16)
    loss3 = multi_focal_loss(logits3, target2, weight=weight2,
                             gamma=gamma, ignore_index=ignore_index)
    loss3 = jax.block_until_ready(loss3)
    ref3 = _reference_loss(logits3, target2, weight2, gamma, ignore_index)
    assert jnp.allclose(loss3, ref3, rtol=1e-4, atol=1e-5), (loss3, ref3)

    print("KERNEL_OK")
</pallas_src>

<mosaic_0001>
module attributes {stable_mosaic.version = 11 : i64} {
  func.func @_multi_focal_loss_kernel(%arg0: i32, %arg1: memref<56x8xf32, #tpu.memory_space<vmem>>, %arg2: memref<56x1xi32, #tpu.memory_space<vmem>>, %arg3: memref<56x1xf32, #tpu.memory_space<vmem>>, %arg4: memref<1x1xf32, #tpu.memory_space<vmem>>, %arg5: memref<1x1xf32, #tpu.memory_space<vmem>>) attributes {dimension_semantics = [#tpu.dimension_semantics<parallel>], iteration_bounds = array<i64: 1>, scalar_prefetch = 0 : i64, scratch_operands = 0 : i64, tpu.core_type = #tpu.core_type<tc>, window_params = [{transform_indices = @transform_0, window_bounds = array<i64: 56, 8>}, {transform_indices = @transform_1, window_bounds = array<i64: 56, 1>}, {transform_indices = @transform_2, window_bounds = array<i64: 56, 1>}, {transform_indices = @transform_3, window_bounds = array<i64: 1, 1>}, {transform_indices = @transform_4, window_bounds = array<i64: 1, 1>}]} {
    %c0 = arith.constant 0 : index
    %c0_0 = arith.constant 0 : index
    %0 = vector.load %arg1[%c0, %c0_0] : memref<56x8xf32, #tpu.memory_space<vmem>>, vector<56x8xf32>
    %c0_1 = arith.constant 0 : index
    %c0_2 = arith.constant 0 : index
    %1 = vector.load %arg2[%c0_1, %c0_2] : memref<56x1xi32, #tpu.memory_space<vmem>>, vector<56x1xi32>
    %c0_3 = arith.constant 0 : index
    %c0_4 = arith.constant 0 : index
    %2 = vector.load %arg3[%c0_3, %c0_4] : memref<56x1xf32, #tpu.memory_space<vmem>>, vector<56x1xf32>
    %c56_i32 = arith.constant 56 : i32
    %3 = arith.muli %arg0, %c56_i32 : i32
    %4 = tpu.iota {dimensions = array<i32: 0>} : vector<56x1xi32>
    %5 = vector.broadcast %3 : i32 to vector<56x1xi32>
    %6 = arith.addi %5, %4 : vector<56x1xi32>
    %c50_i32 = arith.constant 50 : i32
    %7 = vector.broadcast %c50_i32 : i32 to vector<56x1xi32>
    %8 = arith.cmpi slt, %6, %7 : vector<56x1xi32>
    %c-100_i32 = arith.constant -100 : i32
    %9 = vector.broadcast %c-100_i32 : i32 to vector<56x1xi32>
    %10 = arith.cmpi ne, %1, %9 : vector<56x1xi32>
    %11 = arith.andi %8, %10 : vector<56x1xi1>
    %cst = arith.constant 0.000000e+00 : f32
    %12 = vector.shape_cast %11 : vector<56x1xi1> to vector<56x1xi1>
    %13 = vector.broadcast %12 : vector<56x1xi1> to vector<56x8xi1>
    %14 = vector.broadcast %cst : f32 to vector<56x8xf32>
    %15 = arith.select %13, %0, %14 : vector<56x8xi1>, vector<56x8xf32>
    %cst_5 = arith.constant dense<0xFF800000> : vector<56xf32>
    %16 = vector.multi_reduction <maximumf>, %15, %cst_5 [1] : vector<56x8xf32> to vector<56xf32>
    %17 = vector.shape_cast %16 : vector<56xf32> to vector<56x1xf32>
    %18 = vector.broadcast %17 : vector<56x1xf32> to vector<56x8xf32>
    %19 = arith.subf %15, %18 : vector<56x8xf32>
    %20 = math.exp %19 : vector<56x8xf32>
    %cst_6 = arith.constant dense<0.000000e+00> : vector<56xf32>
    %21 = vector.multi_reduction <add>, %20, %cst_6 [1] : vector<56x8xf32> to vector<56xf32>
    %22 = vector.shape_cast %21 : vector<56xf32> to vector<56x1xf32>
    %23 = math.log %22 : vector<56x1xf32>
    %24 = tpu.iota {dimensions = array<i32: 1>} : vector<56x8xi32>
    %25 = vector.broadcast %1 : vector<56x1xi32> to vector<56x8xi32>
    %26 = arith.cmpi eq, %24, %25 : vector<56x8xi32>
    %cst_7 = arith.constant 0.000000e+00 : f32
    %27 = vector.broadcast %cst_7 : f32 to vector<56x8xf32>
    %28 = arith.select %26, %19, %27 : vector<56x8xi1>, vector<56x8xf32>
    %cst_8 = arith.constant dense<0.000000e+00> : vector<56xf32>
    %29 = vector.multi_reduction <add>, %28, %cst_8 [1] : vector<56x8xf32> to vector<56xf32>
    %30 = vector.shape_cast %29 : vector<56xf32> to vector<56x1xf32>
    %31 = arith.subf %30, %23 : vector<56x1xf32>
    %32 = math.exp %31 : vector<56x1xf32>
    %cst_9 = arith.constant 1.000000e+00 : f32
    %33 = vector.broadcast %cst_9 : f32 to vector<56x1xf32>
    %34 = arith.subf %33, %32 : vector<56x1xf32>
    %35 = arith.mulf %34, %34 : vector<56x1xf32>
    %36 = arith.mulf %35, %31 : vector<56x1xf32>
    %cst_10 = arith.constant 0.000000e+00 : f32
    %37 = vector.broadcast %cst_10 : f32 to vector<56x1xf32>
    %38 = arith.subf %37, %2 : vector<56x1xf32>
    %39 = arith.mulf %38, %36 : vector<56x1xf32>
    %cst_11 = arith.constant 0.000000e+00 : f32
    %40 = vector.broadcast %cst_11 : f32 to vector<56x1xf32>
    %41 = arith.select %11, %39, %40 : vector<56x1xi1>, vector<56x1xf32>
    %cst_12 = arith.constant 0.000000e+00 : f32
    %42 = vector.broadcast %cst_12 : f32 to vector<56x1xf32>
    %43 = arith.select %11, %2, %42 : vector<56x1xi1>, vector<56x1xf32>
    %44 = vector.shape_cast %41 : vector<56x1xf32> to vector<1x56x1xf32>
    %cst_13 = arith.constant dense<0.000000e+00> : vector<1xf32>
    %45 = vector.multi_reduction <add>, %44, %cst_13 [1, 2] : vector<1x56x1xf32> to vector<1xf32>
    %46 = vector.shape_cast %45 : vector<1xf32> to vector<1x1x1xf32>
    %47 = vector.extract %46[0, 0, 0] : f32 from vector<1x1x1xf32>
    %48 = vector.broadcast %47 : f32 to vector<1x1xf32>
    %c0_14 = arith.constant 0 : index
    %c0_15 = arith.constant 0 : index
    %49 = vector.load %arg4[%c0_14, %c0_15] : memref<1x1xf32, #tpu.memory_space<vmem>>, vector<1x1xf32>
    tpu.vector_store %arg4[%c0_14, %c0_15], %48 {strides = array<i32>} : memref<1x1xf32, #tpu.memory_space<vmem>>, vector<1x1xf32>,
    %50 = vector.shape_cast %43 : vector<56x1xf32> to vector<1x56x1xf32>
    %cst_16 = arith.constant dense<0.000000e+00> : vector<1xf32>
    %51 = vector.multi_reduction <add>, %50, %cst_16 [1, 2] : vector<1x56x1xf32> to vector<1xf32>
    %52 = vector.shape_cast %51 : vector<1xf32> to vector<1x1x1xf32>
    %53 = vector.extract %52[0, 0, 0] : f32 from vector<1x1x1xf32>
    %54 = vector.broadcast %53 : f32 to vector<1x1xf32>
    %c0_17 = arith.constant 0 : index
    %c0_18 = arith.constant 0 : index
    %55 = vector.load %arg5[%c0_17, %c0_18] : memref<1x1xf32, #tpu.memory_space<vmem>>, vector<1x1xf32>
    tpu.vector_store %arg5[%c0_17, %c0_18], %54 {strides = array<i32>} : memref<1x1xf32, #tpu.memory_space<vmem>>, vector<1x1xf32>,
    return
  }
  func.func @transform_0(%arg0: i32) -> (i32, i32) {
    %c0_i32 = arith.constant 0 : i32
    %c0_i32_0 = arith.constant 0 : i32
    return %arg0, %c0_i32 : i32, i32
  }
  func.func @transform_1(%arg0: i32) -> (i32, i32) {
    %c0_i32 = arith.constant 0 : i32
    %c0_i32_0 = arith.constant 0 : i32
    return %arg0, %c0_i32 : i32, i32
  }
  func.func @transform_2(%arg0: i32) -> (i32, i32) {
    %c0_i32 = arith.constant 0 : i32
    %c0_i32_0 = arith.constant 0 : i32
    return %arg0, %c0_i32 : i32, i32
  }
  func.func @transform_3(%arg0: i32) -> (i32, i32) {
    %c0_i32 = arith.constant 0 : i32
    %c0_i32_0 = arith.constant 0 : i32
    return %arg0, %c0_i32 : i32, i32
  }
  func.func @transform_4(%arg0: i32) -> (i32, i32) {
    %c0_i32 = arith.constant 0 : i32
    %c0_i32_0 = arith.constant 0 : i32
    return %arg0, %c0_i32 : i32, i32
  }
}

</mosaic_0001>

<llo_original>
// kernel: tpu_custom_call.1
$region0: #{tpu_custom_call.1}
  #allocation0 [shape = 'u32[]', space=smem, size = 0x4, offset = 0x4, fixed_abs, tag = 'smem constant byte address 0x4 - core index']
  #allocation1 [shape = 'u32[72,128]{1,0:T(1,128)}', space=vmem, size = 0x9000, scoped, tag = 'internal scratch']
  %s0 = inlined_call_operand.vmem [shape: f32[50,8], index: 0, kind: input, shape index: {}]
  %s1 = inlined_call_operand.vmem [shape: s32[50,1], index: 1, kind: input, shape index: {}]
  %s2 = inlined_call_operand.vmem [shape: f32[50,1], index: 2, kind: input, shape index: {}]
  %s3 = inlined_call_operand.hbm [shape: f32[1,1], index: 3, kind: output, shape index: {0}]
  %s4 = inlined_call_operand.hbm [shape: f32[1,1], index: 4, kind: output, shape index: {1}]
  %5 = xla_tuple %s3, %s4
  %s6 = sld [smem:[#allocation0]]
  $region30: #{tpu_custom_call.1} parent=0
    _
  %s8 = ssub.s32 1, %s6
  %s9 = scalar_select 0, %s8, %s6
  $region1: #{tpu_custom_call.1} parent=0
    #allocation2 [shape = 'u8[512]{0}', space=vmem, size = 0x400, scoped, tag = 'output window, operand 0, single buffered']
    #allocation3 [shape = 's32[1]{0}', space=sflag, size = 0x4, scoped, tag = 'scoped memory for tpu_custom_call.1']
    #allocation4 [shape = 'u8[512]{0}', space=vmem, size = 0x400, scoped, tag = 'output window, operand 1, single buffered']
    #allocation5 [shape = 's32[1]{0}', space=sflag, size = 0x4, scoped, tag = 'scoped memory for tpu_custom_call.1']
    %10 = vsyncpa [#allocation3], 0
    %11 = vsyncpa [#allocation5], 0
    // Predicated region
    $region2: #{tpu_custom_call.1} parent=1 // pred_check
      _
    $region3: #{tpu_custom_call.1} parent=1 // pred_check_branch
      %13 = sbr.rel (0) target = $region5
    $region4: #{tpu_custom_call.1} parent=1 // pred_region
      _
    $region5: #{tpu_custom_call.1} parent=1 // pred_fallthru
      _
    // Predicated region
    $region6: #{tpu_custom_call.1} parent=1 // pred_check
      _
    $region7: #{tpu_custom_call.1} parent=1 // pred_check_branch
      %15 = sbr.rel (0) target = $region9
    $region8: #{tpu_custom_call.1} parent=1 // pred_region
      _
    $region9: #{tpu_custom_call.1} parent=1 // pred_fallthru
      _
    // Predicated region
    $region10: #{tpu_custom_call.1} parent=1 // pred_check
      _
    $region11: #{tpu_custom_call.1} parent=1 // pred_check_branch
      %17 = sbr.rel (0) target = $region13
    $region12: #{tpu_custom_call.1} parent=1 // pred_region
      _
    $region13: #{tpu_custom_call.1} parent=1 // pred_fallthru
      _
    %v18 = vld [vmem:[%s0] sm:$0xff]
    %v19 = vld [vmem:[%s0 + $0x8] sm:$0xff]
    %v20 = vld [vmem:[%s0 + $0x10] sm:$0xff]
    %v21 = vld [vmem:[%s0 + $0x18] sm:$0xff]
    %v22 = vld [vmem:[%s0 + $0x20] sm:$0xff]
    %v23 = vld [vmem:[%s0 + $0x28] sm:$0xff]
    %v24 = vld [vmem:[%s0 + $0x30] sm:$0xff]
    %v25 = vld [vmem:[%s1] sm:$0xff]
    %v26 = vld [vmem:[%s1 + $0x8] sm:$0xff]
    %v27 = vld [vmem:[%s1 + $0x10] sm:$0xff]
    %v28 = vld [vmem:[%s1 + $0x18] sm:$0xff]
    %v29 = vld [vmem:[%s1 + $0x20] sm:$0xff]
    %v30 = vld [vmem:[%s1 + $0x28] sm:$0xff]
    %v31 = vld [vmem:[%s1 + $0x30] sm:$0xff]
    %v32 = vld [vmem:[%s2] sm:$0xff]
    %v33 = vld [vmem:[%s2 + $0x8] sm:$0xff]
    %v34 = vld [vmem:[%s2 + $0x10] sm:$0xff]
    %v35 = vld [vmem:[%s2 + $0x18] sm:$0xff]
    %v36 = vld [vmem:[%s2 + $0x20] sm:$0xff]
    %v37 = vld [vmem:[%s2 + $0x28] sm:$0xff]
    %v38 = vld [vmem:[%s2 + $0x30] sm:$0xff]
    %s39 = smul.u32 0, 56
    %v40 = vlaneseq
    %v41 = vshrl.u32 %v40, 7
    %v42 = vadd.s32 %v41, 8
    %v43 = vadd.s32 %v41, 16
    %v44 = vadd.s32 %v41, 24
    %v45 = vadd.s32 %v41, 32
    %v46 = vadd.s32 %v41, 40
    %v47 = vadd.s32 %v41, 48
    %v48 = vstv %s39
    %v49 = vadd.s32 %v48, %v41
    %v50 = vadd.s32 %v48, %v42
    %v51 = vadd.s32 %v48, %v43
    %v52 = vadd.s32 %v48, %v44
    %v53 = vadd.s32 %v48, %v45
    %v54 = vadd.s32 %v48, %v46
    %v55 = vadd.s32 %v48, %v47
    %vm56 = vcmp.lt.s32.totalorder %v49, 50
    %vm57 = vcmp.lt.s32.totalorder %v50, 50
    %vm58 = vcmp.lt.s32.totalorder %v51, 50
    %vm59 = vcmp.lt.s32.totalorder %v52, 50
    %vm60 = vcmp.lt.s32.totalorder %v53, 50
    %vm61 = vcmp.lt.s32.totalorder %v54, 50
    %vm62 = vcmp.lt.s32.totalorder %v55, 50
    %vm63 = vcmp.ne.s32.totalorder %v25, 4294967196
    %vm64 = vcmp.ne.s32.totalorder %v26, 4294967196
    %vm65 = vcmp.ne.s32.totalorder %v27, 4294967196
    %vm66 = vcmp.ne.s32.totalorder %v28, 4294967196
    %vm67 = vcmp.ne.s32.totalorder %v29, 4294967196
    %vm68 = vcmp.ne.s32.totalorder %v30, 4294967196
    %vm69 = vcmp.ne.s32.totalorder %v31, 4294967196
    %vm70 = vmand %vm56, %vm63
    %vm71 = vmand %vm57, %vm64
    %vm72 = vmand %vm58, %vm65
    %vm73 = vmand %vm59, %vm66
    %vm74 = vmand %vm60, %vm67
    %vm75 = vmand %vm61, %vm68
    %vm76 = vmand %vm62, %vm69
    %v77 = vsel %vm70, 1, 0
    %v78 = vsel %vm71, 1, 0
    %v79 = vsel %vm72, 1, 0
    %v80 = vsel %vm73, 1, 0
    %v81 = vsel %vm74, 1, 0
    %v82 = vsel %vm75, 1, 0
    %v83 = vsel %vm76, 1, 0
    %84 = vset.pattern.permute.xlu0 0
    %85 = vperm.xlu0 %84, %v77
    %v86 = vpop.permute.xlu0 %85
    %87 = vset.pattern.permute.xlu0 0
    %88 = vperm.xlu0 %87, %v78
    %v89 = vpop.permute.xlu0 %88
    %90 = vset.pattern.permute.xlu0 0
    %91 = vperm.xlu0 %90, %v79
    %v92 = vpop.permute.xlu0 %91
    %93 = vset.pattern.permute.xlu0 0
    %94 = vperm.xlu0 %93, %v80
    %v95 = vpop.permute.xlu0 %94
    %96 = vset.pattern.permute.xlu0 0
    %97 = vperm.xlu0 %96, %v81
    %v98 = vpop.permute.xlu0 %97
    %99 = vset.pattern.permute.xlu0 0
    %100 = vperm.xlu0 %99, %v82
    %v101 = vpop.permute.xlu0 %100
    %102 = vset.pattern.permute.xlu0 0
    %103 = vperm.xlu0 %102, %v83
    %v104 = vpop.permute.xlu0 %103
    %vm105 = vcmp.eq.s32.totalorder %v86, 1
    %vm106 = vcmp.eq.s32.totalorder %v89, 1
    %vm107 = vcmp.eq.s32.totalorder %v92, 1
    %vm108 = vcmp.eq.s32.totalorder %v95, 1
    %vm109 = vcmp.eq.s32.totalorder %v98, 1
    %vm110 = vcmp.eq.s32.totalorder %v101, 1
    %vm111 = vcmp.eq.s32.totalorder %v104, 1
    %v112 = vsel %vm105, %v18, 0.0
    %v113 = vsel %vm106, %v19, 0.0
    %v114 = vsel %vm107, %v20, 0.0
    %v115 = vsel %vm108, %v21, 0.0
    %v116 = vsel %vm109, %v22, 0.0
    %v117 = vsel %vm110, %v23, 0.0
    %v118 = vsel %vm111, %v24, 0.0
    %vm119 = vcmask 64512
    %v120 = vsel %vm119, %v112, -inf
    %121 = vmax.xlane.f32.xlu0 %v120
    %v122 = vpop.xlane.xlu0 %121
    %v123 = vsel %vm119, %v113, -inf
    %124 = vmax.xlane.f32.xlu0 %v123
    %v125 = vpop.xlane.xlu0 %124
    %v126 = vsel %vm119, %v114, -inf
    %127 = vmax.xlane.f32.xlu0 %v126
    %v128 = vpop.xlane.xlu0 %127
    %v129 = vsel %vm119, %v115, -inf
    %130 = vmax.xlane.f32.xlu0 %v129
    %v131 = vpop.xlane.xlu0 %130
    %v132 = vsel %vm119, %v116, -inf
    %133 = vmax.xlane.f32.xlu0 %v132
    %v134 = vpop.xlane.xlu0 %133
    %v135 = vsel %vm119, %v117, -inf
    %136 = vmax.xlane.f32.xlu0 %v135
    %v137 = vpop.xlane.xlu0 %136
    %v138 = vsel %vm119, %v118, -inf
    %139 = vmax.xlane.f32.xlu0 %v138
    %v140 = vpop.xlane.xlu0 %139
    %v141 = vsub.f32 %v112, %v122
    %v142 = vsub.f32 %v113, %v125
    %v143 = vsub.f32 %v114, %v128
    %v144 = vsub.f32 %v115, %v131
    %v145 = vsub.f32 %v116, %v134
    %v146 = vsub.f32 %v117, %v137
    %v147 = vsub.f32 %v118, %v140
    %v148 = vmul.f32 %v141, 1.442695
    %v149 = vpow.pop %v148
    %v150 = vmul.f32 %v142, 1.442695
    %v151 = vpow.pop %v150
    %v152 = vmul.f32 %v143, 1.442695
    %v153 = vpow.pop %v152
    %v154 = vmul.f32 %v144, 1.442695
    %v155 = vpow.pop %v154
    %v156 = vmul.f32 %v145, 1.442695
    %v157 = vpow.pop %v156
    %v158 = vmul.f32 %v146, 1.442695
    %v159 = vpow.pop %v158
    %v160 = vmul.f32 %v147, 1.442695
    %v161 = vpow.pop %v160
    %v162 = vsel %vm119, %v149, 0.0
    %163 = vadd.xlane.f32.xlu0 %v162
    %v164 = vpop.xlane.xlu0 %163
    %v165 = vsel %vm119, %v151, 0.0
    %166 = vadd.xlane.f32.xlu0 %v165
    %v167 = vpop.xlane.xlu0 %166
    %v168 = vsel %vm119, %v153, 0.0
    %169 = vadd.xlane.f32.xlu0 %v168
    %v170 = vpop.xlane.xlu0 %169
    %v171 = vsel %vm119, %v155, 0.0
    %172 = vadd.xlane.f32.xlu0 %v171
    %v173 = vpop.xlane.xlu0 %172
    %v174 = vsel %vm119, %v157, 0.0
    %175 = vadd.xlane.f32.xlu0 %v174
    %v176 = vpop.xlane.xlu0 %175
    %v177 = vsel %vm119, %v159, 0.0
    %178 = vadd.xlane.f32.xlu0 %v177
    %v179 = vpop.xlane.xlu0 %178
    %v180 = vsel %vm119, %v161, 0.0
    %181 = vadd.xlane.f32.xlu0 %v180
    %v182 = vpop.xlane.xlu0 %181
    %v183 = vlog2.pop %v164
    %v184 = vmul.f32 %v183, 0.6931472
    %v185 = vlog2.pop %v167
    %v186 = vmul.f32 %v185, 0.6931472
    %v187 = vlog2.pop %v170
    %v188 = vmul.f32 %v187, 0.6931472
    %v189 = vlog2.pop %v173
    %v190 = vmul.f32 %v189, 0.6931472
    %v191 = vlog2.pop %v176
    %v192 = vmul.f32 %v191, 0.6931472
    %v193 = vlog2.pop %v179
    %v194 = vmul.f32 %v193, 0.6931472
    %v195 = vlog2.pop %v182
    %v196 = vmul.f32 %v195, 0.6931472
    %v197 = vlaneseq
    %v198 = vand.u32 %v197, 127
    %199 = vset.pattern.permute.xlu0 0
    %200 = vperm.xlu0 %199, %v25
    %v201 = vpop.permute.xlu0 %200
    %202 = vset.pattern.permute.xlu0 0
    %203 = vperm.xlu0 %202, %v26
    %v204 = vpop.permute.xlu0 %203
    %205 = vset.pattern.permute.xlu0 0
    %206 = vperm.xlu0 %205, %v27
    %v207 = vpop.permute.xlu0 %206
    %208 = vset.pattern.permute.xlu0 0
    %209 = vperm.xlu0 %208, %v28
    %v210 = vpop.permute.xlu0 %209
    %211 = vset.pattern.permute.xlu0 0
    %212 = vperm.xlu0 %211, %v29
    %v213 = vpop.permute.xlu0 %212
    %214 = vset.pattern.permute.xlu0 0
    %215 = vperm.xlu0 %214, %v30
    %v216 = vpop.permute.xlu0 %215
    %217 = vset.pattern.permute.xlu0 0
    %218 = vperm.xlu0 %217, %v31
    %v219 = vpop.permute.xlu0 %218
    %vm220 = vcmp.eq.s32.totalorder %v198, %v201
    %vm221 = vcmp.eq.s32.totalorder %v198, %v204
    %vm222 = vcmp.eq.s32.totalorder %v198, %v207
    %vm223 = vcmp.eq.s32.totalorder %v198, %v210
    %vm224 = vcmp.eq.s32.totalorder %v198, %v213
    %vm225 = vcmp.eq.s32.totalorder %v198, %v216
    %vm226 = vcmp.eq.s32.totalorder %v198, %v219
    %v227 = vsel %vm220, %v141, 0.0
    %v228 = vsel %vm221, %v142, 0.0
    %v229 = vsel %vm222, %v143, 0.0
    %v230 = vsel %vm223, %v144, 0.0
    %v231 = vsel %vm224, %v145, 0.0
    %v232 = vsel %vm225, %v146, 0.0
    %v233 = vsel %vm226, %v147, 0.0
    %v234 = vsel %vm119, %v227, 0.0
    %235 = vadd.xlane.f32.xlu0 %v234
    %v236 = vpop.xlane.xlu0 %235
    %v237 = vsel %vm119, %v228, 0.0
    %238 = vadd.xlane.f32.xlu0 %v237
    %v239 = vpop.xlane.xlu0 %238
    %v240 = vsel %vm119, %v229, 0.0
    %241 = vadd.xlane.f32.xlu0 %v240
    %v242 = vpop.xlane.xlu0 %241
    %v243 = vsel %vm119, %v230, 0.0
    %244 = vadd.xlane.f32.xlu0 %v243
    %v245 = vpop.xlane.xlu0 %244
    %v246 = vsel %vm119, %v231, 0.0
    %247 = vadd.xlane.f32.xlu0 %v246
    %v248 = vpop.xlane.xlu0 %247
    %v249 = vsel %vm119, %v232, 0.0
    %250 = vadd.xlane.f32.xlu0 %v249
    %v251 = vpop.xlane.xlu0 %250
    %v252 = vsel %vm119, %v233, 0.0
    %253 = vadd.xlane.f32.xlu0 %v252
    %v254 = vpop.xlane.xlu0 %253
    %v255 = vsub.f32 %v236, %v184
    %v256 = vsub.f32 %v239, %v186
    %v257 = vsub.f32 %v242, %v188
    %v258 = vsub.f32 %v245, %v190
    %v259 = vsub.f32 %v248, %v192
    %v260 = vsub.f32 %v251, %v194
    %v261 = vsub.f32 %v254, %v196
    %v262 = vmul.f32 %v255, 1.442695
    %v263 = vpow.pop %v262
    %v264 = vmul.f32 %v256, 1.442695
    %v265 = vpow.pop %v264
    %v266 = vmul.f32 %v257, 1.442695
    %v267 = vpow.pop %v266
    %v268 = vmul.f32 %v258, 1.442695
    %v269 = vpow.pop %v268
    %v270 = vmul.f32 %v259, 1.442695
    %v271 = vpow.pop %v270
    %v272 = vmul.f32 %v260, 1.442695
    %v273 = vpow.pop %v272
    %v274 = vmul.f32 %v261, 1.442695
    %v275 = vpow.pop %v274
    %v276 = vsub.f32 1.0, %v263
    %v277 = vsub.f32 1.0, %v265
    %v278 = vsub.f32 1.0, %v267
    %v279 = vsub.f32 1.0, %v269
    %v280 = vsub.f32 1.0, %v271
    %v281 = vsub.f32 1.0, %v273
    %v282 = vsub.f32 1.0, %v275
    %v283 = vmul.f32 %v276, %v276
    %v284 = vmul.f32 %v277, %v277
    %v285 = vmul.f32 %v278, %v278
    %v286 = vmul.f32 %v279, %v279
    %v287 = vmul.f32 %v280, %v280
    %v288 = vmul.f32 %v281, %v281
    %v289 = vmul.f32 %v282, %v282
    %v290 = vmul.f32 %v283, %v255
    %v291 = vmul.f32 %v284, %v256
    %v292 = vmul.f32 %v285, %v257
    %v293 = vmul.f32 %v286, %v258
    %v294 = vmul.f32 %v287, %v259
    %v295 = vmul.f32 %v288, %v260
    %v296 = vmul.f32 %v289, %v261
    %v297 = vsub.f32 0.0, %v32
    %v298 = vsub.f32 0.0, %v33
    %v299 = vsub.f32 0.0, %v34
    %v300 = vsub.f32 0.0, %v35
    %v301 = vsub.f32 0.0, %v36
    %v302 = vsub.f32 0.0, %v37
    %v303 = vsub.f32 0.0, %v38
    %v304 = vmul.f32 %v297, %v290
    %v305 = vmul.f32 %v298, %v291
    %v306 = vmul.f32 %v299, %v292
    %v307 = vmul.f32 %v300, %v293
    %v308 = vmul.f32 %v301, %v294
    %v309 = vmul.f32 %v302, %v295
    %v310 = vmul.f32 %v303, %v296
    %v311 = vsel %vm70, %v304, 0.0
    %v312 = vsel %vm71, %v305, 0.0
    %v313 = vsel %vm72, %v306, 0.0
    %v314 = vsel %vm73, %v307, 0.0
    %v315 = vsel %vm74, %v308, 0.0
    %v316 = vsel %vm75, %v309, 0.0
    %v317 = vsel %vm76, %v310, 0.0
    %v318 = vsel %vm70, %v32, 0.0
    %v319 = vsel %vm71, %v33, 0.0
    %v320 = vsel %vm72, %v34, 0.0
    %v321 = vsel %vm73, %v35, 0.0
    %v322 = vsel %vm74, %v36, 0.0
    %v323 = vsel %vm75, %v37, 0.0
    %v324 = vsel %vm76, %v38, 0.0
    %vm325 = vcmask 7168
    %v326 = vsel %vm325, %v311, 0.0
    %v327 = vsel %vm325, %v312, 0.0
    %v328 = vadd.f32 %v326, %v327
    %v329 = vsel %vm325, %v313, 0.0
    %v330 = vadd.f32 %v328, %v329
    %v331 = vsel %vm325, %v314, 0.0
    %v332 = vadd.f32 %v330, %v331
    %v333 = vsel %vm325, %v315, 0.0
    %v334 = vadd.f32 %v332, %v333
    %v335 = vsel %vm325, %v316, 0.0
    %v336 = vadd.f32 %v334, %v335
    %v337 = vsel %vm325, %v317, 0.0
    %v338 = vadd.f32 %v336, %v337
    %339 = vadd.xlane.f32.xlu0 %v338
    %v340 = vpop.xlane.xlu0 %339
    %v341 = vrot.slane %v340, 4
    %v342 = vadd.f32 %v340, %v341
    %v343 = vrot.slane %v342, 2
    %v344 = vadd.f32 %v342, %v343
    %v345 = vrot.slane %v344, 1
    %v346 = vadd.f32 %v344, %v345
    %s347 = vtos %v346
    %v348 = vstv %s347
    %vm349 = vcmask 0
    %350 = vst.msk [vmem:[#allocation2] sm:$0x1] %vm349, %v348
    %v351 = vsel %vm325, %v318, 0.0
    %v352 = vsel %vm325, %v319, 0.0
    %v353 = vadd.f32 %v351, %v352
    %v354 = vsel %vm325, %v320, 0.0
    %v355 = vadd.f32 %v353, %v354
    %v356 = vsel %vm325, %v321, 0.0
    %v357 = vadd.f32 %v355, %v356
    %v358 = vsel %vm325, %v322, 0.0
    %v359 = vadd.f32 %v357, %v358
    %v360 = vsel %vm325, %v323, 0.0
    %v361 = vadd.f32 %v359, %v360
    %v362 = vsel %vm325, %v324, 0.0
    %v363 = vadd.f32 %v361, %v362
    %364 = vadd.xlane.f32.xlu0 %v363
    %v365 = vpop.xlane.xlu0 %364
    %v366 = vrot.slane %v365, 4
    %v367 = vadd.f32 %v365, %v366
    %v368 = vrot.slane %v367, 2
    %v369 = vadd.f32 %v367, %v368
    %v370 = vrot.slane %v369, 1
    %v371 = vadd.f32 %v369, %v370
    %s372 = vtos %v371
    %v373 = vstv %s372
    %374 = vst.msk [vmem:[#allocation4] sm:$0x1] %vm349, %v373
    // Predicated region
    $region14: #{tpu_custom_call.1} parent=1 // pred_check
      _
    $region15: #{tpu_custom_call.1} parent=1 // pred_check_branch
      %376 = sbr.rel (0) target = $region17
    $region16: #{tpu_custom_call.1} parent=1 // pred_region
      %378 = vsyncadd [#allocation3], 0
      %s380 = sshll.u32 [#allocation2], 4
      %s381 = int_to_ptr.vmem [resolvable:$true] %s380
      %s382 = sshll.u32 %s3, 4
      %s383 = int_to_ptr.hbm [resolvable:$true] %s382
      %385 = dma.vmem_to_hbm [thread:$0]  %s381, 16, %s383, [#allocation3]
    $region17: #{tpu_custom_call.1} parent=1 // pred_fallthru
      _
    // Predicated region
    $region18: #{tpu_custom_call.1} parent=1 // pred_check
      _
    $region19: #{tpu_custom_call.1} parent=1 // pred_check_branch
      %387 = sbr.rel (0) target = $region21
    $region20: #{tpu_custom_call.1} parent=1 // pred_region
      %389 = vsyncadd [#allocation5], 0
      %s391 = sshll.u32 [#allocation4], 4
      %s392 = int_to_ptr.vmem [resolvable:$true] %s391
      %s393 = sshll.u32 %s4, 4
      %s394 = int_to_ptr.hbm [resolvable:$true] %s393
      %396 = dma.vmem_to_hbm [thread:$0]  %s392, 16, %s394, [#allocation5]
    $region21: #{tpu_custom_call.1} parent=1 // pred_fallthru
      _
    // Predicated region
    $region22: #{tpu_custom_call.1} parent=1 // pred_check
      _
    $region23: #{tpu_custom_call.1} parent=1 // pred_check_branch
      %398 = sbr.rel (0) target = $region25
    $region24: #{tpu_custom_call.1} parent=1 // pred_region
      %400 = dma.done [#allocation3], 16
    $region25: #{tpu_custom_call.1} parent=1 // pred_fallthru
      _
    // Predicated region
    $region26: #{tpu_custom_call.1} parent=1 // pred_check
      _
    $region27: #{tpu_custom_call.1} parent=1 // pred_check_branch
      %402 = sbr.rel (0) target = $region29
    $region28: #{tpu_custom_call.1} parent=1 // pred_region
      %404 = dma.done [#allocation5], 16
    $region29: #{tpu_custom_call.1} parent=1 // pred_fallthru
      _
    %405 = vsyncpa [#allocation3], 1
    %406 = vsyncpa [#allocation5], 1

</llo_original>
